<compile_context>
chip_gen: v7x
topology: tpu7x:2x2x1
jax: 0.10.0
libtpu: 0.0.40
codegen_flags: <defaults>
</compile_context>

<pallas_src>
import functools

import jax
import jax.numpy as jnp
from jax import lax
from jax.experimental import pallas as pl
from jax.experimental.pallas import tpu as pltpu


def _cdiv(a, b):
    return -(-a // b)


def _round_up(a, m):
    return _cdiv(a, m) * m


def _vmem_capacity_bytes():
    """Per-core VMEM capacity; falls back to the v7x per-TC size (safe everywhere)."""
    try:
        info = pltpu.get_tpu_info()
        cap = getattr(info, "vmem_capacity_bytes", None)
        if cap:
            return int(cap)
    except Exception:
        pass
    return 64 * 1024 * 1024


def _ip_kernel_resident(z_ref, out_ref, *, tm, tn, act):
    # z_ref: (n_pad_z, D), resident in VMEM for the whole grid (single-buffered).
    # Both operand tiles are sliced from the resident copy -> no extra HBM streams.
    i = pl.multiple_of(pl.program_id(0) * tm, tm)
    j = pl.multiple_of(pl.program_id(1) * tn, tn)
    zi = z_ref[pl.ds(i, tm), :]                                 # (tm, D)
    zj = z_ref[pl.ds(j, tn), :]                                 # (tn, D)
    acc = lax.dot_general(
        zi, zj,
        dimension_numbers=(((1,), (1,)), ((), ())),             # contract on D (z @ z.T, NT-style)
        preferred_element_type=jnp.float32)
    if act is not None:
        acc = act(acc)
    out_ref[...] = acc.astype(out_ref.dtype)


def _ip_kernel_streamed(zi_ref, zj_ref, out_ref, *, act):
    # Fallback when z is too large to keep resident: stream (tm, D) / (tn, D) tiles.
    acc = lax.dot_general(
        zi_ref[...], zj_ref[...],
        dimension_numbers=(((1,), (1,)), ((), ())),
        preferred_element_type=jnp.float32)
    if act is not None:
        acc = act(acc)
    out_ref[...] = acc.astype(out_ref.dtype)


def _pick_tile(n, target, multiple, override):
    """Tile size (multiple of `multiple`), number of tiles, padded extent with minimal padding."""
    if override is not None:
        t = _round_up(int(override), multiple)
        n_tiles = _cdiv(n, t)
        return t, n_tiles, t * n_tiles
    n_tiles = _cdiv(n, target)
    t = _round_up(_cdiv(n, n_tiles), multiple)
    return t, n_tiles, t * n_tiles


def inner_product_decoder(z, *, act=None, out_dtype=None, tm=None, tn=None, resident=None):
    """adj = act(z @ z.T); act defaults to identity (matches the PyTorch module).

    out_dtype: optionally emit the adjacency in a narrower dtype (e.g. jnp.bfloat16) to halve
    the dominant HBM output-write traffic; accumulation stays f32 on the MXU.
    """
    N, D = z.shape
    in_itemsize = jnp.dtype(z.dtype).itemsize
    out_dtype = z.dtype if out_dtype is None else jnp.dtype(out_dtype)
    out_itemsize = jnp.dtype(out_dtype).itemsize

    # Tile selection: target ~512 (write-bound; large lane-dense stores), but shrink to the
    # nearest legal multiple (8 for sublanes / 128 for lanes) so padded output area is minimal.
    tm, n_row_tiles, pad_m = _pick_tile(N, 512, 8, tm)
    tn, n_col_tiles, pad_n = _pick_tile(N, 512, 128, tn)

    # One zero-padded copy of z covers both row (pad_m) and column (pad_n) tilings; padded rows
    # are zero, so padded output entries are zero and are sliced away at the end.
    n_pad_z = max(pad_m, pad_n)
    z_p = z if n_pad_z == N else jnp.pad(z, ((0, n_pad_z - N), (0, 0)))

    grid = (n_row_tiles, n_col_tiles)
    cap = _vmem_capacity_bytes()
    headroom = 8 * 1024 * 1024
    out_tile_bytes = 2 * tm * tn * out_itemsize          # double-buffered output tile

    # Resident z is single-buffered (constant block index + pl.Buffered(1)).
    resident_z_bytes = n_pad_z * D * in_itemsize
    resident_total = resident_z_bytes + out_tile_bytes
    if resident is None:
        # ~0.75 * per-core VMEM: ≈48 MiB/TC on v7x (each TC holds its own copy under megacore),
        # ≈96 MiB on v5e/v6e — avoids the streamed path's (n_row_tiles)x repeated z reads.
        resident = resident_total + headroom <= int(0.75 * cap)

    if resident:
        kernel = functools.partial(_ip_kernel_resident, tm=tm, tn=tn, act=act)
        in_specs = [pl.BlockSpec((n_pad_z, D), lambda i, j: (0, 0),
                                 pipeline_mode=pl.Buffered(1))]
        operands = (z_p,)
        vmem_needed = resident_total
        read_bytes = n_pad_z * D * in_itemsize
    else:
        kernel = functools.partial(_ip_kernel_streamed, act=act)
        in_specs = [pl.BlockSpec((tm, D), lambda i, j: (i, 0)),
                    pl.BlockSpec((tn, D), lambda i, j: (j, 0))]
        operands = (z_p, z_p)
        vmem_needed = 2 * tm * D * in_itemsize + 2 * tn * D * in_itemsize + out_tile_bytes
        read_bytes = D * in_itemsize * (pad_m * n_col_tiles + pad_n * n_row_tiles)

    # Single margin (vmem_needed already counts the double buffers), capped at physical VMEM.
    vmem_limit = int(max(32 * 1024 * 1024, min(cap, vmem_needed + headroom)))

    cost = pl.CostEstimate(
        flops=2 * pad_m * pad_n * D,
        bytes_accessed=out_itemsize * pad_m * pad_n + read_bytes,
        transcendentals=0)

    out = pl.pallas_call(
        kernel,
        out_shape=jax.ShapeDtypeStruct((pad_m, pad_n), out_dtype),
        grid_spec=pltpu.PrefetchScalarGridSpec(
            num_scalar_prefetch=0,
            grid=grid,
            in_specs=in_specs,
            out_specs=pl.BlockSpec((tm, tn), lambda i, j: (i, j)),
        ),
        compiler_params=pltpu.CompilerParams(
            dimension_semantics=("parallel", "parallel"),   # megacore row/col sharding on v7x
            vmem_limit_bytes=vmem_limit,
        ),
        cost_estimate=cost,
    )(*operands)

    # TODO(synk): a packed/triangular output format (if the consumer accepts it) would genuinely
    # halve HBM write bytes; writing acc and acc.T in an upper-triangular grid would not.
    if pad_m == N and pad_n == N:
        return out
    return out[:N, :N]


if __name__ == "__main__":
    key = jax.random.PRNGKey(0)
    k1, k2 = jax.random.split(key)

    # Case 1: tile-divisible N (resident path, no padding).
    N1, D1 = 256, 64
    z1 = jax.random.normal(k1, (N1, D1), dtype=jnp.float32)
    adj1 = jax.block_until_ready(inner_product_decoder(z1))
    ref1 = z1 @ z1.T
    assert adj1.shape == (N1, N1)
    assert jnp.allclose(adj1, ref1, atol=1e-4, rtol=1e-4)

    # Case 2: awkward N (exercises independent row/col minimal padding, resident path).
    N2, D2 = 200, 32
    z2 = jax.random.normal(k2, (N2, D2), dtype=jnp.float32)
    adj2 = jax.block_until_ready(inner_product_decoder(z2))
    ref2 = z2 @ z2.T
    assert adj2.shape == (N2, N2)
    assert jnp.allclose(adj2, ref2, atol=1e-4, rtol=1e-4)

    # Case 3: forced streamed fallback path (covers the large-N code path at small shapes).
    adj3 = jax.block_until_ready(inner_product_decoder(z2, resident=False))
    assert jnp.allclose(adj3, ref2, atol=1e-4, rtol=1e-4)

    print("KERNEL_OK")
</pallas_src>

<mosaic_0001>
module attributes {stable_mosaic.version = 11 : i64} {
  func.func @_ip_kernel_resident(%arg0: i32, %arg1: i32, %arg2: memref<256x64xf32, #tpu.memory_space<vmem>>, %arg3: memref<256x256xf32, #tpu.memory_space<vmem>>) attributes {dimension_semantics = [#tpu.dimension_semantics<parallel>, #tpu.dimension_semantics<parallel>], iteration_bounds = array<i64: 1, 1>, scalar_prefetch = 0 : i64, scratch_operands = 0 : i64, tpu.core_type = #tpu.core_type<tc>, window_params = [{pipeline_mode = #tpu.pipeline_mode<synchronous>, transform_indices = @transform_0, window_bounds = array<i64: 256, 64>}, {transform_indices = @transform_1, window_bounds = array<i64: 256, 256>}]} {
    %c256_i32 = arith.constant 256 : i32
    %0 = arith.muli %arg0, %c256_i32 : i32
    %1 = tpu.assume_multiple %0, 256 : i32
    %c256_i32_0 = arith.constant 256 : i32
    %2 = arith.muli %arg1, %c256_i32_0 : i32
    %3 = tpu.assume_multiple %2, 256 : i32
    %4 = arith.index_cast %1 : i32 to index
    %c0 = arith.constant 0 : index
    %5 = vector.load %arg2[%4, %c0] : memref<256x64xf32, #tpu.memory_space<vmem>>, vector<256x64xf32>
    %6 = arith.index_cast %3 : i32 to index
    %c0_1 = arith.constant 0 : index
    %7 = vector.load %arg2[%6, %c0_1] : memref<256x64xf32, #tpu.memory_space<vmem>>, vector<256x64xf32>
    %cst = arith.constant dense<0.000000e+00> : vector<256x256xf32>
    %8 = tpu.matmul %5, %7, %cst {dimension_numbers = #tpu.dot_dimension_numbers<[1], [1], [0], [0], [0, 0, 1, 0], [], []>} : vector<256x64xf32>, vector<256x64xf32>, vector<256x256xf32> -> vector<256x256xf32>
    %c0_2 = arith.constant 0 : index
    %c0_3 = arith.constant 0 : index
    %9 = vector.load %arg3[%c0_2, %c0_3] : memref<256x256xf32, #tpu.memory_space<vmem>>, vector<256x256xf32>
    tpu.vector_store %arg3[%c0_2, %c0_3], %8 {strides = array<i32>} : memref<256x256xf32, #tpu.memory_space<vmem>>, vector<256x256xf32>,
    return
  }
  func.func @transform_0(%arg0: i32, %arg1: i32) -> (i32, i32) {
    %c0_i32 = arith.constant 0 : i32
    %c0_i32_0 = arith.constant 0 : i32
    %c0_i32_1 = arith.constant 0 : i32
    return %c0_i32, %c0_i32_0 : i32, i32
  }
  func.func @transform_1(%arg0: i32, %arg1: i32) -> (i32, i32) {
    %c0_i32 = arith.constant 0 : i32
    return %arg0, %arg1 : i32, i32
  }
}

</mosaic_0001>

<llo_original>
// kernel: tpu_custom_call.1
$region0: #{tpu_custom_call.1}
  #allocation0 [shape = 'u32[]', space=smem, size = 0x4, offset = 0x4, fixed_abs, tag = 'smem constant byte address 0x4 - core index']
  #allocation1 [shape = 'u32[144,128]{1,0:T(1,128)}', space=vmem, size = 0x12000, scoped, tag = 'internal scratch']
  %s0 = inlined_call_operand.vmem [shape: f32[256,64], index: 0, kind: input, shape index: {}]
  %s1 = inlined_call_operand.hbm [shape: f32[256,256], index: 1, kind: output, shape index: {}]
  %s2 = sld [smem:[#allocation0]]
  $region14: #{tpu_custom_call.1} parent=0
    _
  %s4 = ssub.s32 1, %s2
  %s5 = scalar_select 0, %s4, %s2
  $region1: #{tpu_custom_call.1} parent=0
    #allocation2 [shape = 'u8[262144]{0}', space=vmem, size = 0x40000, scoped, tag = 'output window, operand 0, single buffered']
    #allocation3 [shape = 's32[1]{0}', space=sflag, size = 0x4, scoped, tag = 'scoped memory for tpu_custom_call.1']
    %6 = vsyncpa [#allocation3], 0
    // Predicated region
    $region2: #{tpu_custom_call.1} parent=1 // pred_check
      _
    $region3: #{tpu_custom_call.1} parent=1 // pred_check_branch
      %8 = sbr.rel (0) target = $region5
    $region4: #{tpu_custom_call.1} parent=1 // pred_region
      _
    $region5: #{tpu_custom_call.1} parent=1 // pred_fallthru
      _
    %s9 = smul.u32 0, 256
    %s10 = smul.u32 0, 256
    %s11 = scalar_lea.vmem %s0, %s9
    %v12 = vld [vmem:[%s11] sm:$0xff]
    %v13 = vld [vmem:[%s11 + $0x8] sm:$0xff]
    %v14 = vld [vmem:[%s11 + $0x10] sm:$0xff]
    %v15 = vld [vmem:[%s11 + $0x18] sm:$0xff]
    %v16 = vld [vmem:[%s11 + $0x20] sm:$0xff]
    %v17 = vld [vmem:[%s11 + $0x28] sm:$0xff]
    %v18 = vld [vmem:[%s11 + $0x30] sm:$0xff]
    %v19 = vld [vmem:[%s11 + $0x38] sm:$0xff]
    %v20 = vld [vmem:[%s11 + $0x40] sm:$0xff]
    %v21 = vld [vmem:[%s11 + $0x48] sm:$0xff]
    %v22 = vld [vmem:[%s11 + $0x50] sm:$0xff]
    %v23 = vld [vmem:[%s11 + $0x58] sm:$0xff]
    %v24 = vld [vmem:[%s11 + $0x60] sm:$0xff]
    %v25 = vld [vmem:[%s11 + $0x68] sm:$0xff]
    %v26 = vld [vmem:[%s11 + $0x70] sm:$0xff]
    %v27 = vld [vmem:[%s11 + $0x78] sm:$0xff]
    %v28 = vld [vmem:[%s11 + $0x80] sm:$0xff]
    %v29 = vld [vmem:[%s11 + $0x88] sm:$0xff]
    %v30 = vld [vmem:[%s11 + $0x90] sm:$0xff]
    %v31 = vld [vmem:[%s11 + $0x98] sm:$0xff]
    %v32 = vld [vmem:[%s11 + $0xa0] sm:$0xff]
    %v33 = vld [vmem:[%s11 + $0xa8] sm:$0xff]
    %v34 = vld [vmem:[%s11 + $0xb0] sm:$0xff]
    %v35 = vld [vmem:[%s11 + $0xb8] sm:$0xff]
    %v36 = vld [vmem:[%s11 + $0xc0] sm:$0xff]
    %v37 = vld [vmem:[%s11 + $0xc8] sm:$0xff]
    %v38 = vld [vmem:[%s11 + $0xd0] sm:$0xff]
    %v39 = vld [vmem:[%s11 + $0xd8] sm:$0xff]
    %v40 = vld [vmem:[%s11 + $0xe0] sm:$0xff]
    %v41 = vld [vmem:[%s11 + $0xe8] sm:$0xff]
    %v42 = vld [vmem:[%s11 + $0xf0] sm:$0xff]
    %v43 = vld [vmem:[%s11 + $0xf8] sm:$0xff]
    %s44 = scalar_lea.vmem %s0, %s10
    %v45 = vld [vmem:[%s44] sm:$0xff]
    %v46 = vld [vmem:[%s44 + $0x8] sm:$0xff]
    %v47 = vld [vmem:[%s44 + $0x10] sm:$0xff]
    %v48 = vld [vmem:[%s44 + $0x18] sm:$0xff]
    %v49 = vld [vmem:[%s44 + $0x20] sm:$0xff]
    %v50 = vld [vmem:[%s44 + $0x28] sm:$0xff]
    %v51 = vld [vmem:[%s44 + $0x30] sm:$0xff]
    %v52 = vld [vmem:[%s44 + $0x38] sm:$0xff]
    %v53 = vld [vmem:[%s44 + $0x40] sm:$0xff]
    %v54 = vld [vmem:[%s44 + $0x48] sm:$0xff]
    %v55 = vld [vmem:[%s44 + $0x50] sm:$0xff]
    %v56 = vld [vmem:[%s44 + $0x58] sm:$0xff]
    %v57 = vld [vmem:[%s44 + $0x60] sm:$0xff]
    %v58 = vld [vmem:[%s44 + $0x68] sm:$0xff]
    %v59 = vld [vmem:[%s44 + $0x70] sm:$0xff]
    %v60 = vld [vmem:[%s44 + $0x78] sm:$0xff]
    %v61 = vld [vmem:[%s44 + $0x80] sm:$0xff]
    %v62 = vld [vmem:[%s44 + $0x88] sm:$0xff]
    %v63 = vld [vmem:[%s44 + $0x90] sm:$0xff]
    %v64 = vld [vmem:[%s44 + $0x98] sm:$0xff]
    %v65 = vld [vmem:[%s44 + $0xa0] sm:$0xff]
    %v66 = vld [vmem:[%s44 + $0xa8] sm:$0xff]
    %v67 = vld [vmem:[%s44 + $0xb0] sm:$0xff]
    %v68 = vld [vmem:[%s44 + $0xb8] sm:$0xff]
    %v69 = vld [vmem:[%s44 + $0xc0] sm:$0xff]
    %v70 = vld [vmem:[%s44 + $0xc8] sm:$0xff]
    %v71 = vld [vmem:[%s44 + $0xd0] sm:$0xff]
    %v72 = vld [vmem:[%s44 + $0xd8] sm:$0xff]
    %v73 = vld [vmem:[%s44 + $0xe0] sm:$0xff]
    %v74 = vld [vmem:[%s44 + $0xe8] sm:$0xff]
    %v75 = vld [vmem:[%s44 + $0xf0] sm:$0xff]
    %v76 = vld [vmem:[%s44 + $0xf8] sm:$0xff]
    %vm77 = vcmask 523264
    %v79 = vsel %vm77, %v12, 0
    %v82 = vsel %vm77, %v13, 0
    %v85 = vsel %vm77, %v14, 0
    %v88 = vsel %vm77, %v15, 0
    %v91 = vsel %vm77, %v16, 0
    %v94 = vsel %vm77, %v17, 0
    %v97 = vsel %vm77, %v18, 0
    %v100 = vsel %vm77, %v19, 0
    %v103 = vsel %vm77, %v20, 0
    %v106 = vsel %vm77, %v21, 0
    %v109 = vsel %vm77, %v22, 0
    %v112 = vsel %vm77, %v23, 0
    %v115 = vsel %vm77, %v24, 0
    %v118 = vsel %vm77, %v25, 0
    %v121 = vsel %vm77, %v26, 0
    %v124 = vsel %vm77, %v27, 0
    %v127 = vsel %vm77, %v28, 0
    %v130 = vsel %vm77, %v29, 0
    %v133 = vsel %vm77, %v30, 0
    %v136 = vsel %vm77, %v31, 0
    %v139 = vsel %vm77, %v32, 0
    %v142 = vsel %vm77, %v33, 0
    %v145 = vsel %vm77, %v34, 0
    %v148 = vsel %vm77, %v35, 0
    %v151 = vsel %vm77, %v36, 0
    %v154 = vsel %vm77, %v37, 0
    %v157 = vsel %vm77, %v38, 0
    %v160 = vsel %vm77, %v39, 0
    %v163 = vsel %vm77, %v40, 0
    %v166 = vsel %vm77, %v41, 0
    %v169 = vsel %vm77, %v42, 0
    %v172 = vsel %vm77, %v43, 0
    %v175 = vsel %vm77, %v45, 0
    %v178 = vsel %vm77, %v46, 0
    %v181 = vsel %vm77, %v47, 0
    %v184 = vsel %vm77, %v48, 0
    %v187 = vsel %vm77, %v49, 0
    %v190 = vsel %vm77, %v50, 0
    %v193 = vsel %vm77, %v51, 0
    %v196 = vsel %vm77, %v52, 0
    %v199 = vsel %vm77, %v53, 0
    %v202 = vsel %vm77, %v54, 0
    %v205 = vsel %vm77, %v55, 0
    %v208 = vsel %vm77, %v56, 0
    %v211 = vsel %vm77, %v57, 0
    %v214 = vsel %vm77, %v58, 0
    %v217 = vsel %vm77, %v59, 0
    %v220 = vsel %vm77, %v60, 0
    %v223 = vsel %vm77, %v61, 0
    %v226 = vsel %vm77, %v62, 0
    %v229 = vsel %vm77, %v63, 0
    %v232 = vsel %vm77, %v64, 0
    %v235 = vsel %vm77, %v65, 0
    %v238 = vsel %vm77, %v66, 0
    %v241 = vsel %vm77, %v67, 0
    %v244 = vsel %vm77, %v68, 0
    %v247 = vsel %vm77, %v69, 0
    %v250 = vsel %vm77, %v70, 0
    %v253 = vsel %vm77, %v71, 0
    %v256 = vsel %vm77, %v72, 0
    %v259 = vsel %vm77, %v73, 0
    %v262 = vsel %vm77, %v74, 0
    %v265 = vsel %vm77, %v75, 0
    %v268 = vsel %vm77, %v76, 0
    %270 = vmatprep.subr.mxu0 0.0
    %271 = vmatpush1.xpose.msra.mxu0 %v175
    %272 = vmatprep.subr.mxu0 0.0
    %273 = vmatpush1.xpose.msra.mxu0 %v178
    %274 = vmatprep.subr.mxu0 0.0
    %275 = vmatpush1.xpose.msra.mxu0 %v181
    %276 = vmatprep.subr.mxu0 0.0
    %277 = vmatpush1.xpose.msra.mxu0 %v184
    %278 = vmatprep.subr.mxu0 0.0
    %279 = vmatpush1.xpose.msra.mxu0 %v187
    %280 = vmatprep.subr.mxu0 0.0
    %281 = vmatpush1.xpose.msra.mxu0 %v190
    %282 = vmatprep.subr.mxu0 0.0
    %283 = vmatpush1.xpose.msra.mxu0 %v193
    %284 = vmatprep.subr.mxu0 0.0
    %285 = vmatpush1.xpose.msra.mxu0 %v196
    %286 = vmatprep.subr.mxu0 0.0
    %287 = vmatpush1.xpose.msra.mxu0 %v199
    %288 = vmatprep.subr.mxu0 0.0
    %289 = vmatpush1.xpose.msra.mxu0 %v202
    %290 = vmatprep.subr.mxu0 0.0
    %291 = vmatpush1.xpose.msra.mxu0 %v205
    %292 = vmatprep.subr.mxu0 0.0
    %293 = vmatpush1.xpose.msra.mxu0 %v208
    %294 = vmatprep.subr.mxu0 0.0
    %295 = vmatpush1.xpose.msra.mxu0 %v211
    %296 = vmatprep.subr.mxu0 0.0
    %297 = vmatpush1.xpose.msra.mxu0 %v214
    %298 = vmatprep.subr.mxu0 0.0
    %299 = vmatpush1.xpose.msra.mxu0 %v217
    %300 = vmatprep.subr.mxu0 0.0
    %301 = vmatpush1.xpose.msra.mxu0 %v220
    %302 = vmatprep.subr.mxu0 0.0
    %303 = vmatpush1.xpose.msra.mxu0 %v223
    %304 = vmatprep.subr.mxu0 0.0
    %305 = vmatpush1.xpose.msra.mxu0 %v226
    %306 = vmatprep.subr.mxu0 0.0
    %307 = vmatpush1.xpose.msra.mxu0 %v229
    %308 = vmatprep.subr.mxu0 0.0
    %309 = vmatpush1.xpose.msra.mxu0 %v232
    %310 = vmatprep.subr.mxu0 0.0
    %311 = vmatpush1.xpose.msra.mxu0 %v235
    %312 = vmatprep.subr.mxu0 0.0
    %313 = vmatpush1.xpose.msra.mxu0 %v238
    %314 = vmatprep.subr.mxu0 0.0
    %315 = vmatpush1.xpose.msra.mxu0 %v241
    %316 = vmatprep.subr.mxu0 0.0
    %317 = vmatpush1.xpose.msra.mxu0 %v244
    %318 = vmatprep.subr.mxu0 0.0
    %319 = vmatpush1.xpose.msra.mxu0 %v247
    %320 = vmatprep.subr.mxu0 0.0
    %321 = vmatpush1.xpose.msra.mxu0 %v250
    %322 = vmatprep.subr.mxu0 0.0
    %323 = vmatpush1.xpose.msra.mxu0 %v253
    %324 = vmatprep.subr.mxu0 0.0
    %325 = vmatpush1.xpose.msra.mxu0 %v256
    %326 = vmatprep.subr.mxu0 0.0
    %327 = vmatpush1.xpose.msra.mxu0 %v259
    %328 = vmatprep.subr.mxu0 0.0
    %329 = vmatpush1.xpose.msra.mxu0 %v262
    %330 = vmatprep.subr.mxu0 0.0
    %331 = vmatpush1.xpose.msra.mxu0 %v265
    %332 = vmatprep.subr.mxu0 0.0
    %333 = vmatpush1.xpose.msra.mxu0 %v268
    %334 = vmatprep.mubr.f32.mxu0 0.0
    %335 = vmatmul.mubr.f32.gmra.mrb[0].mxu0 %v79
    %v336 = vpop.f32.mrb[0].mxu0
    %v337 = vadd.f32 0.0, %v336
    %v338 = vpop.f32.mrb[0].mxu0
    %v339 = vadd.f32 0.0, %v338
    %340 = vmatprep.mubr.f32.mxu0 0.0
    %341 = vmatmul.mubr.f32.gmra.mrb[0].mxu0 %v82
    %v342 = vpop.f32.mrb[0].mxu0
    %v343 = vadd.f32 0.0, %v342
    %v344 = vpop.f32.mrb[0].mxu0
    %v345 = vadd.f32 0.0, %v344
    %346 = vmatprep.mubr.f32.mxu0 0.0
    %347 = vmatmul.mubr.f32.gmra.mrb[0].mxu0 %v85
    %v348 = vpop.f32.mrb[0].mxu0
    %v349 = vadd.f32 0.0, %v348
    %v350 = vpop.f32.mrb[0].mxu0
    %v351 = vadd.f32 0.0, %v350
    %352 = vmatprep.mubr.f32.mxu0 0.0
    %353 = vmatmul.mubr.f32.gmra.mrb[0].mxu0 %v88
    %v354 = vpop.f32.mrb[0].mxu0
    %v355 = vadd.f32 0.0, %v354
    %v356 = vpop.f32.mrb[0].mxu0
    %v357 = vadd.f32 0.0, %v356
    %358 = vmatprep.mubr.f32.mxu0 0.0
    %359 = vmatmul.mubr.f32.gmra.mrb[0].mxu0 %v91
    %v360 = vpop.f32.mrb[0].mxu0
    %v361 = vadd.f32 0.0, %v360
    %v362 = vpop.f32.mrb[0].mxu0
    %v363 = vadd.f32 0.0, %v362
    %364 = vmatprep.mubr.f32.mxu0 0.0
    %365 = vmatmul.mubr.f32.gmra.mrb[0].mxu0 %v94
    %v366 = vpop.f32.mrb[0].mxu0
    %v367 = vadd.f32 0.0, %v366
    %v368 = vpop.f32.mrb[0].mxu0
    %v369 = vadd.f32 0.0, %v368
    %370 = vmatprep.mubr.f32.mxu0 0.0
    %371 = vmatmul.mubr.f32.gmra.mrb[0].mxu0 %v97
    %v372 = vpop.f32.mrb[0].mxu0
    %v373 = vadd.f32 0.0, %v372
    %v374 = vpop.f32.mrb[0].mxu0
    %v375 = vadd.f32 0.0, %v374
    %376 = vmatprep.mubr.f32.mxu0 0.0
    %377 = vmatmul.mubr.f32.gmra.mrb[0].mxu0 %v100
    %v378 = vpop.f32.mrb[0].mxu0
    %v379 = vadd.f32 0.0, %v378
    %v380 = vpop.f32.mrb[0].mxu0
    %v381 = vadd.f32 0.0, %v380
    %382 = vmatprep.mubr.f32.mxu0 0.0
    %383 = vmatmul.mubr.f32.gmra.mrb[0].mxu0 %v103
    %v384 = vpop.f32.mrb[0].mxu0
    %v385 = vadd.f32 0.0, %v384
    %v386 = vpop.f32.mrb[0].mxu0
    %v387 = vadd.f32 0.0, %v386
    %388 = vmatprep.mubr.f32.mxu0 0.0
    %389 = vmatmul.mubr.f32.gmra.mrb[0].mxu0 %v106
    %v390 = vpop.f32.mrb[0].mxu0
    %v391 = vadd.f32 0.0, %v390
    %v392 = vpop.f32.mrb[0].mxu0
    %v393 = vadd.f32 0.0, %v392
    %394 = vmatprep.mubr.f32.mxu0 0.0
    %395 = vmatmul.mubr.f32.gmra.mrb[0].mxu0 %v109
    %v396 = vpop.f32.mrb[0].mxu0
    %v397 = vadd.f32 0.0, %v396
    %v398 = vpop.f32.mrb[0].mxu0
    %v399 = vadd.f32 0.0, %v398
    %400 = vmatprep.mubr.f32.mxu0 0.0
    %401 = vmatmul.mubr.f32.gmra.mrb[0].mxu0 %v112
    %v402 = vpop.f32.mrb[0].mxu0
    %v403 = vadd.f32 0.0, %v402
    %v404 = vpop.f32.mrb[0].mxu0
    %v405 = vadd.f32 0.0, %v404
    %406 = vmatprep.mubr.f32.mxu0 0.0
    %407 = vmatmul.mubr.f32.gmra.mrb[0].mxu0 %v115
    %v408 = vpop.f32.mrb[0].mxu0
    %v409 = vadd.f32 0.0, %v408
    %v410 = vpop.f32.mrb[0].mxu0
    %v411 = vadd.f32 0.0, %v410
    %412 = vmatprep.mubr.f32.mxu0 0.0
    %413 = vmatmul.mubr.f32.gmra.mrb[0].mxu0 %v118
    %v414 = vpop.f32.mrb[0].mxu0
    %v415 = vadd.f32 0.0, %v414
    %v416 = vpop.f32.mrb[0].mxu0
    %v417 = vadd.f32 0.0, %v416
    %418 = vmatprep.mubr.f32.mxu0 0.0
    %419 = vmatmul.mubr.f32.gmra.mrb[0].mxu0 %v121
    %v420 = vpop.f32.mrb[0].mxu0
    %v421 = vadd.f32 0.0, %v420
    %v422 = vpop.f32.mrb[0].mxu0
    %v423 = vadd.f32 0.0, %v422
    %424 = vmatprep.mubr.f32.mxu0 0.0
    %425 = vmatmul.mubr.f32.gmra.mrb[0].mxu0 %v124
    %v426 = vpop.f32.mrb[0].mxu0
    %v427 = vadd.f32 0.0, %v426
    %v428 = vpop.f32.mrb[0].mxu0
    %v429 = vadd.f32 0.0, %v428
    %430 = vmatprep.mubr.f32.mxu0 0.0
    %431 = vmatmul.mubr.f32.gmra.mrb[0].mxu0 %v127
    %v432 = vpop.f32.mrb[0].mxu0
    %v433 = vadd.f32 0.0, %v432
    %v434 = vpop.f32.mrb[0].mxu0
    %v435 = vadd.f32 0.0, %v434
    %436 = vmatprep.mubr.f32.mxu0 0.0
    %437 = vmatmul.mubr.f32.gmra.mrb[0].mxu0 %v130
    %v438 = vpop.f32.mrb[0].mxu0
    %v439 = vadd.f32 0.0, %v438
    %v440 = vpop.f32.mrb[0].mxu0
    %v441 = vadd.f32 0.0, %v440
    %442 = vmatprep.mubr.f32.mxu0 0.0
    %443 = vmatmul.mubr.f32.gmra.mrb[0].mxu0 %v133
    %v444 = vpop.f32.mrb[0].mxu0
    %v445 = vadd.f32 0.0, %v444
    %v446 = vpop.f32.mrb[0].mxu0
    %v447 = vadd.f32 0.0, %v446
    %448 = vmatprep.mubr.f32.mxu0 0.0
    %449 = vmatmul.mubr.f32.gmra.mrb[0].mxu0 %v136
    %v450 = vpop.f32.mrb[0].mxu0
    %v451 = vadd.f32 0.0, %v450
    %v452 = vpop.f32.mrb[0].mxu0
    %v453 = vadd.f32 0.0, %v452
    %454 = vmatprep.mubr.f32.mxu0 0.0
    %455 = vmatmul.mubr.f32.gmra.mrb[0].mxu0 %v139
    %v456 = vpop.f32.mrb[0].mxu0
    %v457 = vadd.f32 0.0, %v456
    %v458 = vpop.f32.mrb[0].mxu0
    %v459 = vadd.f32 0.0, %v458
    %460 = vmatprep.mubr.f32.mxu0 0.0
    %461 = vmatmul.mubr.f32.gmra.mrb[0].mxu0 %v142
    %v462 = vpop.f32.mrb[0].mxu0
    %v463 = vadd.f32 0.0, %v462
    %v464 = vpop.f32.mrb[0].mxu0
    %v465 = vadd.f32 0.0, %v464
    %466 = vmatprep.mubr.f32.mxu0 0.0
    %467 = vmatmul.mubr.f32.gmra.mrb[0].mxu0 %v145
    %v468 = vpop.f32.mrb[0].mxu0
    %v469 = vadd.f32 0.0, %v468
    %v470 = vpop.f32.mrb[0].mxu0
    %v471 = vadd.f32 0.0, %v470
    %472 = vmatprep.mubr.f32.mxu0 0.0
    %473 = vmatmul.mubr.f32.gmra.mrb[0].mxu0 %v148
    %v474 = vpop.f32.mrb[0].mxu0
    %v475 = vadd.f32 0.0, %v474
    %v476 = vpop.f32.mrb[0].mxu0
    %v477 = vadd.f32 0.0, %v476
    %478 = vmatprep.mubr.f32.mxu0 0.0
    %479 = vmatmul.mubr.f32.gmra.mrb[0].mxu0 %v151
    %v480 = vpop.f32.mrb[0].mxu0
    %v481 = vadd.f32 0.0, %v480
    %v482 = vpop.f32.mrb[0].mxu0
    %v483 = vadd.f32 0.0, %v482
    %484 = vmatprep.mubr.f32.mxu0 0.0
    %485 = vmatmul.mubr.f32.gmra.mrb[0].mxu0 %v154
    %v486 = vpop.f32.mrb[0].mxu0
    %v487 = vadd.f32 0.0, %v486
    %v488 = vpop.f32.mrb[0].mxu0
    %v489 = vadd.f32 0.0, %v488
    %490 = vmatprep.mubr.f32.mxu0 0.0
    %491 = vmatmul.mubr.f32.gmra.mrb[0].mxu0 %v157
    %v492 = vpop.f32.mrb[0].mxu0
    %v493 = vadd.f32 0.0, %v492
    %v494 = vpop.f32.mrb[0].mxu0
    %v495 = vadd.f32 0.0, %v494
    %496 = vmatprep.mubr.f32.mxu0 0.0
    %497 = vmatmul.mubr.f32.gmra.mrb[0].mxu0 %v160
    %v498 = vpop.f32.mrb[0].mxu0
    %v499 = vadd.f32 0.0, %v498
    %v500 = vpop.f32.mrb[0].mxu0
    %v501 = vadd.f32 0.0, %v500
    %502 = vmatprep.mubr.f32.mxu0 0.0
    %503 = vmatmul.mubr.f32.gmra.mrb[0].mxu0 %v163
    %v504 = vpop.f32.mrb[0].mxu0
    %v505 = vadd.f32 0.0, %v504
    %v506 = vpop.f32.mrb[0].mxu0
    %v507 = vadd.f32 0.0, %v506
    %508 = vmatprep.mubr.f32.mxu0 0.0
    %509 = vmatmul.mubr.f32.gmra.mrb[0].mxu0 %v166
    %v510 = vpop.f32.mrb[0].mxu0
    %v511 = vadd.f32 0.0, %v510
    %v512 = vpop.f32.mrb[0].mxu0
    %v513 = vadd.f32 0.0, %v512
    %514 = vmatprep.mubr.f32.mxu0 0.0
    %515 = vmatmul.mubr.f32.gmra.mrb[0].mxu0 %v169
    %v516 = vpop.f32.mrb[0].mxu0
    %v517 = vadd.f32 0.0, %v516
    %v518 = vpop.f32.mrb[0].mxu0
    %v519 = vadd.f32 0.0, %v518
    %520 = vmatprep.mubr.f32.mxu0 0.0
    %521 = vmatmul.mubr.f32.gmra.mrb[0].mxu0 %v172
    %v522 = vpop.f32.mrb[0].mxu0
    %v523 = vadd.f32 0.0, %v522
    %v524 = vpop.f32.mrb[0].mxu0
    %v525 = vadd.f32 0.0, %v524
    %526 = vdwg.mxu0
    %527 = vst [vmem:[#allocation2] sm:$0xff] %v337
    %528 = vst [vmem:[#allocation2 + $0x8] sm:$0xff] %v339
    %529 = vst [vmem:[#allocation2 + $0x10] sm:$0xff] %v343
    %530 = vst [vmem:[#allocation2 + $0x18] sm:$0xff] %v345
    %531 = vst [vmem:[#allocation2 + $0x20] sm:$0xff] %v349
    %532 = vst [vmem:[#allocation2 + $0x28] sm:$0xff] %v351
    %533 = vst [vmem:[#allocation2 + $0x30] sm:$0xff] %v355
    %534 = vst [vmem:[#allocation2 + $0x38] sm:$0xff] %v357
    %535 = vst [vmem:[#allocation2 + $0x40] sm:$0xff] %v361
    %536 = vst [vmem:[#allocation2 + $0x48] sm:$0xff] %v363
    %537 = vst [vmem:[#allocation2 + $0x50] sm:$0xff] %v367
    %538 = vst [vmem:[#allocation2 + $0x58] sm:$0xff] %v369
    %539 = vst [vmem:[#allocation2 + $0x60] sm:$0xff] %v373
    %540 = vst [vmem:[#allocation2 + $0x68] sm:$0xff] %v375
    %541 = vst [vmem:[#allocation2 + $0x70] sm:$0xff] %v379
    %542 = vst [vmem:[#allocation2 + $0x78] sm:$0xff] %v381
    %543 = vst [vmem:[#allocation2 + $0x80] sm:$0xff] %v385
    %544 = vst [vmem:[#allocation2 + $0x88] sm:$0xff] %v387
    %545 = vst [vmem:[#allocation2 + $0x90] sm:$0xff] %v391
    %546 = vst [vmem:[#allocation2 + $0x98] sm:$0xff] %v393
    %547 = vst [vmem:[#allocation2 + $0xa0] sm:$0xff] %v397
    %548 = vst [vmem:[#allocation2 + $0xa8] sm:$0xff] %v399
    %549 = vst [vmem:[#allocation2 + $0xb0] sm:$0xff] %v403
    %550 = vst [vmem:[#allocation2 + $0xb8] sm:$0xff] %v405
    %551 = vst [vmem:[#allocation2 + $0xc0] sm:$0xff] %v409
    %552 = vst [vmem:[#allocation2 + $0xc8] sm:$0xff] %v411
    %553 = vst [vmem:[#allocation2 + $0xd0] sm:$0xff] %v415
    %554 = vst [vmem:[#allocation2 + $0xd8] sm:$0xff] %v417
    %555 = vst [vmem:[#allocation2 + $0xe0] sm:$0xff] %v421
    %556 = vst [vmem:[#allocation2 + $0xe8] sm:$0xff] %v423
    %557 = vst [vmem:[#allocation2 + $0xf0] sm:$0xff] %v427
    %558 = vst [vmem:[#allocation2 + $0xf8] sm:$0xff] %v429
    %559 = vst [vmem:[#allocation2 + $0x100] sm:$0xff] %v433
    %560 = vst [vmem:[#allocation2 + $0x108] sm:$0xff] %v435
    %561 = vst [vmem:[#allocation2 + $0x110] sm:$0xff] %v439
    %562 = vst [vmem:[#allocation2 + $0x118] sm:$0xff] %v441
    %563 = vst [vmem:[#allocation2 + $0x120] sm:$0xff] %v445
    %564 = vst [vmem:[#allocation2 + $0x128] sm:$0xff] %v447
    %565 = vst [vmem:[#allocation2 + $0x130] sm:$0xff] %v451
    %566 = vst [vmem:[#allocation2 + $0x138] sm:$0xff] %v453
    %567 = vst [vmem:[#allocation2 + $0x140] sm:$0xff] %v457
    %568 = vst [vmem:[#allocation2 + $0x148] sm:$0xff] %v459
    %569 = vst [vmem:[#allocation2 + $0x150] sm:$0xff] %v463
    %570 = vst [vmem:[#allocation2 + $0x158] sm:$0xff] %v465
    %571 = vst [vmem:[#allocation2 + $0x160] sm:$0xff] %v469
    %572 = vst [vmem:[#allocation2 + $0x168] sm:$0xff] %v471
    %573 = vst [vmem:[#allocation2 + $0x170] sm:$0xff] %v475
    %574 = vst [vmem:[#allocation2 + $0x178] sm:$0xff] %v477
    %575 = vst [vmem:[#allocation2 + $0x180] sm:$0xff] %v481
    %576 = vst [vmem:[#allocation2 + $0x188] sm:$0xff] %v483
    %577 = vst [vmem:[#allocation2 + $0x190] sm:$0xff] %v487
    %578 = vst [vmem:[#allocation2 + $0x198] sm:$0xff] %v489
    %579 = vst [vmem:[#allocation2 + $0x1a0] sm:$0xff] %v493
    %580 = vst [vmem:[#allocation2 + $0x1a8] sm:$0xff] %v495
    %581 = vst [vmem:[#allocation2 + $0x1b0] sm:$0xff] %v499
    %582 = vst [vmem:[#allocation2 + $0x1b8] sm:$0xff] %v501
    %583 = vst [vmem:[#allocation2 + $0x1c0] sm:$0xff] %v505
    %584 = vst [vmem:[#allocation2 + $0x1c8] sm:$0xff] %v507
    %585 = vst [vmem:[#allocation2 + $0x1d0] sm:$0xff] %v511
    %586 = vst [vmem:[#allocation2 + $0x1d8] sm:$0xff] %v513
    %587 = vst [vmem:[#allocation2 + $0x1e0] sm:$0xff] %v517
    %588 = vst [vmem:[#allocation2 + $0x1e8] sm:$0xff] %v519
    %589 = vst [vmem:[#allocation2 + $0x1f0] sm:$0xff] %v523
    %590 = vst [vmem:[#allocation2 + $0x1f8] sm:$0xff] %v525
    // Predicated region
    $region6: #{tpu_custom_call.1} parent=1 // pred_check
      _
    $region7: #{tpu_custom_call.1} parent=1 // pred_check_branch
      %592 = sbr.rel (0) target = $region9
    $region8: #{tpu_custom_call.1} parent=1 // pred_region
      %s594 = ssub.s32 8192, 8192
      %595 = vsyncadd [#allocation3], %s594
      %s596 = sshll.u32 [#allocation2], 4
      %s597 = int_to_ptr.vmem [resolvable:$true] %s596
      %602 = dma.vmem_to_hbm [thread:$0]  %s597, 8192, %s1, [#allocation3], 256, 256, 16
    $region9: #{tpu_custom_call.1} parent=1 // pred_fallthru
      _
    // Predicated region
    $region10: #{tpu_custom_call.1} parent=1 // pred_check
      _
    $region11: #{tpu_custom_call.1} parent=1 // pred_check_branch
      %604 = sbr.rel (0) target = $region13
    $region12: #{tpu_custom_call.1} parent=1 // pred_region
      %605 = dma.done [#allocation3], 8192
    $region13: #{tpu_custom_call.1} parent=1 // pred_fallthru
      _
    %606 = vsyncpa [#allocation3], 1

</llo_original>
